<compile_context>
chip_gen: v6e
topology: v6e:2x2x1
jax: 0.10.0
libtpu: 0.0.40
codegen_flags: <defaults>
</compile_context>

<pallas_src>
import functools

import jax
import jax.numpy as jnp
from jax.experimental import pallas as pl
from jax.experimental.pallas import tpu as pltpu

_LANE = 128
_SUBLANE = 8


def _round_up(a, b):
    return ((a + b - 1) // b) * b


def _tversky_kernel(x_ref, t_ref, out_ref, acc_ref, *, beta, count,
                    tile_elems, chunks_per_part, apply_mask):
    p = pl.program_id(0)          # partition (parallel; split across TCs on v7x)
    i = pl.program_id(1)          # chunk within partition (reduction axis)

    @pl.when(i == 0)
    def _():
        acc_ref[...] = jnp.zeros_like(acc_ref)

    x = x_ref[...].astype(jnp.float32)     # native-dtype load, f32 math
    t = t_ref[...].astype(jnp.float32)

    prob = jax.nn.sigmoid(x)
    tp = prob * t
    fn = (1.0 - prob) * t
    fp = prob * (1.0 - t)
    alpha = 1.0 - beta
    xt = alpha * fp + beta * fn
    eps = jnp.float32(1e-09)
    num = xt + eps
    den = tp + xt + eps
    # pl.reciprocal keeps the divide off the VALU; approx=False preserves
    # reference-level accuracy (the kernel is HBM-bound either way).
    loss = num * pl.reciprocal(den, approx=False)

    if apply_mask:
        # In-kernel tail mask (only compiled in when padding exists). Padded
        # elements (x=0, t=0) would otherwise contribute loss == 1.0 each.
        rows, lanes = loss.shape
        chunk = p * chunks_per_part + i
        base = chunk * tile_elems
        ridx = jax.lax.broadcasted_iota(jnp.int32, (rows, lanes), 0)
        lidx = jax.lax.broadcasted_iota(jnp.int32, (rows, lanes), 1)
        local = ridx * lanes + lidx
        loss = jnp.where(local < (jnp.int32(count) - base), loss, 0.0)

    # Partial-reduce to an (8, 128) vreg-shaped accumulator: pure VPU adds,
    # no per-step XLU reduce, no serial scalar read-modify-write.
    rows, lanes = loss.shape
    acc_ref[...] += jnp.sum(loss.reshape(rows // _SUBLANE, _SUBLANE, lanes),
                            axis=0)

    @pl.when(i == pl.num_programs(1) - 1)
    def _():
        # One sublane reduce per partition; lane reduce + /N happen outside.
        out_ref[...] = jnp.sum(acc_ref[...], axis=0, keepdims=True)


def tversky_loss_with_logits(inputs, targets, beta=0.7, *,
                             block_rows=2048, num_parts=2):
    """Mean Tversky loss over all elements (matches the PyTorch module)."""
    assert inputs.shape == targets.shape
    n = int(inputs.size)
    assert n > 0

    x = jnp.ravel(inputs)
    t = jnp.ravel(targets)
    # Keep native floating dtypes (bf16 stays bf16 on the wire); only promote
    # non-float inputs so sigmoid / arithmetic are well-defined.
    if not jnp.issubdtype(x.dtype, jnp.floating):
        x = x.astype(jnp.float32)
    if not jnp.issubdtype(t.dtype, jnp.floating):
        t = t.astype(x.dtype)

    rows_needed = pl.cdiv(n, _LANE)
    br = min(block_rows, _round_up(rows_needed, _SUBLANE))
    br = _round_up(br, _SUBLANE)
    tile_elems = br * _LANE

    chunks = pl.cdiv(n, tile_elems)
    parts = num_parts if chunks >= num_parts else 1
    chunks_per_part = pl.cdiv(chunks, parts)
    total_chunks = chunks_per_part * parts
    padded = total_chunks * tile_elems
    pad = padded - n
    if pad:
        x = jnp.pad(x, (0, pad))
        t = jnp.pad(t, (0, pad))
    x = x.reshape(padded // _LANE, _LANE)
    t = t.reshape(padded // _LANE, _LANE)

    kernel = functools.partial(
        _tversky_kernel,
        beta=float(beta),
        count=n,
        tile_elems=tile_elems,
        chunks_per_part=chunks_per_part,
        apply_mask=(pad != 0),
    )

    in_map = lambda p, i: (p * chunks_per_part + i, 0)

    partials = pl.pallas_call(
        kernel,
        out_shape=jax.ShapeDtypeStruct((parts, _LANE), jnp.float32),
        grid_spec=pltpu.PrefetchScalarGridSpec(
            num_scalar_prefetch=0,
            grid=(parts, chunks_per_part),
            in_specs=[
                pl.BlockSpec((br, _LANE), in_map),
                pl.BlockSpec((br, _LANE), in_map),
            ],
            out_specs=pl.BlockSpec((1, _LANE), lambda p, i: (p, 0)),
            scratch_shapes=[pltpu.VMEM((_SUBLANE, _LANE), jnp.float32)],
        ),
        compiler_params=pltpu.CompilerParams(
            dimension_semantics=("parallel", "arbitrary"),
        ),
    )(x, t)

    # Tiny (parts, 128) cross-lane reduce + mean normalization in the wrapper.
    return jnp.sum(partials) / jnp.float32(n)


def _reference(inputs, targets, beta=0.7):
    p = jax.nn.sigmoid(inputs.astype(jnp.float32))
    t = targets.astype(jnp.float32)
    tp = p * t
    fn = (1.0 - p) * t
    fp = p * (1.0 - t)
    alpha = 1.0 - beta
    x = alpha * fp + beta * fn
    eps = 1e-09
    loss = (x + eps) / (tp + x + eps)
    return jnp.mean(loss)


if __name__ == "__main__":
    key = jax.random.PRNGKey(0)
    k1, k2, k3, k4 = jax.random.split(key, 4)

    # Small NCHW shapes consistent with a segmentation-style loss.
    B, C, H, W = 2, 4, 16, 16
    logits = jax.random.normal(k1, (B, C, H, W), dtype=jnp.float32)
    targets = (jax.random.uniform(k2, (B, C, H, W)) > 0.5).astype(jnp.float32)

    loss = tversky_loss_with_logits(logits, targets, beta=0.7)
    loss = jax.block_until_ready(loss)
    ref = _reference(logits, targets, beta=0.7)
    assert jnp.allclose(loss, ref, atol=1e-5, rtol=1e-5), (loss, ref)

    # Second check: non-tile-multiple size with small blocks + 2 partitions to
    # exercise the in-kernel tail mask and the parallel/arbitrary grid path.
    shape2 = (3, 5, 17, 13)
    logits2 = jax.random.normal(k3, shape2, dtype=jnp.float32)
    targets2 = (jax.random.uniform(k4, shape2) > 0.5).astype(jnp.float32)
    loss2 = tversky_loss_with_logits(logits2, targets2, beta=0.7,
                                     block_rows=8, num_parts=2)
    loss2 = jax.block_until_ready(loss2)
    ref2 = _reference(logits2, targets2, beta=0.7)
    assert jnp.allclose(loss2, ref2, atol=1e-5, rtol=1e-5), (loss2, ref2)

    print("KERNEL_OK")
</pallas_src>

<mosaic_0001>
module attributes {stable_mosaic.version = 11 : i64} {
  func.func @_tversky_kernel(%arg0: i32, %arg1: i32, %arg2: memref<16x128xf32, #tpu.memory_space<vmem>>, %arg3: memref<16x128xf32, #tpu.memory_space<vmem>>, %arg4: memref<1x128xf32, #tpu.memory_space<vmem>>, %arg5: memref<8x128xf32, #tpu.memory_space<vmem>>) attributes {dimension_semantics = [#tpu.dimension_semantics<parallel>, #tpu.dimension_semantics<arbitrary>], iteration_bounds = array<i64: 1, 1>, scalar_prefetch = 0 : i64, scratch_operands = 1 : i64, tpu.core_type = #tpu.core_type<tc>, window_params = [{transform_indices = @transform_0, window_bounds = array<i64: 16, 128>}, {transform_indices = @transform_1, window_bounds = array<i64: 16, 128>}, {transform_indices = @transform_2, window_bounds = array<i64: 1, 128>}]} {
    %c0_i32 = arith.constant 0 : i32
    %0 = arith.cmpi eq, %arg1, %c0_i32 : i32
    %1 = arith.extui %0 : i1 to i32
    %c0_i32_0 = arith.constant 0 : i32
    %2 = arith.cmpi ne, %1, %c0_i32_0 : i32
    scf.if %2 {
      %cst_17 = arith.constant 0.000000e+00 : f32
      %37 = vector.broadcast %cst_17 : f32 to vector<8x128xf32>
      %c0_18 = arith.constant 0 : index
      %c0_19 = arith.constant 0 : index
      %38 = vector.load %arg5[%c0_18, %c0_19] : memref<8x128xf32, #tpu.memory_space<vmem>>, vector<8x128xf32>
      tpu.vector_store %arg5[%c0_18, %c0_19], %37 {strides = array<i32>} : memref<8x128xf32, #tpu.memory_space<vmem>>, vector<8x128xf32>,
    } else {
    }
    %c0 = arith.constant 0 : index
    %c0_1 = arith.constant 0 : index
    %3 = vector.load %arg2[%c0, %c0_1] : memref<16x128xf32, #tpu.memory_space<vmem>>, vector<16x128xf32>
    %c0_2 = arith.constant 0 : index
    %c0_3 = arith.constant 0 : index
    %4 = vector.load %arg3[%c0_2, %c0_3] : memref<16x128xf32, #tpu.memory_space<vmem>>, vector<16x128xf32>
    %5 = arith.negf %3 : vector<16x128xf32>
    %6 = math.exp %5 : vector<16x128xf32>
    %cst = arith.constant 1.000000e+00 : f32
    %7 = vector.broadcast %cst : f32 to vector<16x128xf32>
    %8 = arith.addf %7, %6 : vector<16x128xf32>
    %9 = arith.divf %7, %8 : vector<16x128xf32>
    %10 = arith.mulf %9, %4 : vector<16x128xf32>
    %cst_4 = arith.constant 1.000000e+00 : f32
    %11 = vector.broadcast %cst_4 : f32 to vector<16x128xf32>
    %12 = arith.subf %11, %9 : vector<16x128xf32>
    %13 = arith.mulf %12, %4 : vector<16x128xf32>
    %cst_5 = arith.constant 1.000000e+00 : f32
    %14 = vector.broadcast %cst_5 : f32 to vector<16x128xf32>
    %15 = arith.subf %14, %4 : vector<16x128xf32>
    %16 = arith.mulf %9, %15 : vector<16x128xf32>
    %cst_6 = arith.constant 3.000000e-01 : f32
    %17 = vector.broadcast %cst_6 : f32 to vector<16x128xf32>
    %18 = arith.mulf %17, %16 : vector<16x128xf32>
    %cst_7 = arith.constant 0.699999988 : f32
    %19 = vector.broadcast %cst_7 : f32 to vector<16x128xf32>
    %20 = arith.mulf %19, %13 : vector<16x128xf32>
    %21 = arith.addf %18, %20 : vector<16x128xf32>
    %cst_8 = arith.constant 9.99999971E-10 : f32
    %22 = vector.broadcast %cst_8 : f32 to vector<16x128xf32>
    %23 = arith.addf %21, %22 : vector<16x128xf32>
    %24 = arith.addf %10, %21 : vector<16x128xf32>
    %cst_9 = arith.constant 9.99999971E-10 : f32
    %25 = vector.broadcast %cst_9 : f32 to vector<16x128xf32>
    %26 = arith.addf %24, %25 : vector<16x128xf32>
    %27 = tpu.reciprocal %26 : vector<16x128xf32> -> vector<16x128xf32>
    %28 = arith.mulf %23, %27 : vector<16x128xf32>
    %c0_10 = arith.constant 0 : index
    %c0_11 = arith.constant 0 : index
    %29 = vector.load %arg5[%c0_10, %c0_11] : memref<8x128xf32, #tpu.memory_space<vmem>>, vector<8x128xf32>
    %30 = vector.shape_cast %28 : vector<16x128xf32> to vector<2x8x128xf32>
    %cst_12 = arith.constant dense<0.000000e+00> : vector<8x128xf32>
    %31 = vector.multi_reduction <add>, %30, %cst_12 [0] : vector<2x8x128xf32> to vector<8x128xf32>
    %32 = arith.addf %29, %31 : vector<8x128xf32>
    %c0_13 = arith.constant 0 : index
    %c0_14 = arith.constant 0 : index
    %33 = vector.load %arg5[%c0_13, %c0_14] : memref<8x128xf32, #tpu.memory_space<vmem>>, vector<8x128xf32>
    tpu.vector_store %arg5[%c0_13, %c0_14], %32 {strides = array<i32>} : memref<8x128xf32, #tpu.memory_space<vmem>>, vector<8x128xf32>,
    %c0_i32_15 = arith.constant 0 : i32
    %34 = arith.cmpi eq, %arg1, %c0_i32_15 : i32
    %35 = arith.extui %34 : i1 to i32
    %c0_i32_16 = arith.constant 0 : i32
    %36 = arith.cmpi ne, %35, %c0_i32_16 : i32
    scf.if %36 {
      %c0_17 = arith.constant 0 : index
      %c0_18 = arith.constant 0 : index
      %37 = vector.load %arg5[%c0_17, %c0_18] : memref<8x128xf32, #tpu.memory_space<vmem>>, vector<8x128xf32>
      %cst_19 = arith.constant dense<0.000000e+00> : vector<128xf32>
      %38 = vector.multi_reduction <add>, %37, %cst_19 [0] : vector<8x128xf32> to vector<128xf32>
      %39 = vector.shape_cast %38 : vector<128xf32> to vector<1x128xf32>
      %c0_20 = arith.constant 0 : index
      %c0_21 = arith.constant 0 : index
      %40 = vector.load %arg4[%c0_20, %c0_21] : memref<1x128xf32, #tpu.memory_space<vmem>>, vector<1x128xf32>
      tpu.vector_store %arg4[%c0_20, %c0_21], %39 {strides = array<i32>} : memref<1x128xf32, #tpu.memory_space<vmem>>, vector<1x128xf32>,
    } else {
    }
    return
  }
  func.func @transform_0(%arg0: i32, %arg1: i32) -> (i32, i32) {
    %c1_i32 = arith.constant 1 : i32
    %0 = arith.muli %arg0, %c1_i32 : i32
    %1 = arith.addi %0, %arg1 : i32
    %c0_i32 = arith.constant 0 : i32
    %c0_i32_0 = arith.constant 0 : i32
    return %1, %c0_i32 : i32, i32
  }
  func.func @transform_1(%arg0: i32, %arg1: i32) -> (i32, i32) {
    %c1_i32 = arith.constant 1 : i32
    %0 = arith.muli %arg0, %c1_i32 : i32
    %1 = arith.addi %0, %arg1 : i32
    %c0_i32 = arith.constant 0 : i32
    %c0_i32_0 = arith.constant 0 : i32
    return %1, %c0_i32 : i32, i32
  }
  func.func @transform_2(%arg0: i32, %arg1: i32) -> (i32, i32) {
    %c0_i32 = arith.constant 0 : i32
    %c0_i32_0 = arith.constant 0 : i32
    return %arg0, %c0_i32 : i32, i32
  }
}

</mosaic_0001>

<llo_original>
// kernel: tpu_custom_call.1
$region0: #{tpu_custom_call.1}
  #allocation0 [shape = 'u32[]', space=smem, size = 0x4, offset = 0x4, fixed_abs, tag = 'smem constant byte address 0x4 - core index']
  #allocation1 [shape = 'u32[144,128]{1,0:T(1,128)}', space=vmem, size = 0x12000, scoped, tag = 'internal scratch']
  #allocation2 [shape = 'f32[8,128]{1,0:T(8,128)}', space=vmem, size = 0x1000, scoped, tag = 'scratch operand']
  %s0 = inlined_call_operand.hbm [shape: f32[16,128], index: 0, kind: input, shape index: {}]
  %s1 = inlined_call_operand.hbm [shape: f32[16,128], index: 1, kind: input, shape index: {}]
  %s2 = inlined_call_operand.hbm [shape: f32[1,128], index: 2, kind: output, shape index: {}]
  %s3 = sld [smem:[#allocation0]]
  $region34: #{tpu_custom_call.1} parent=0
    _
  %s5 = ssub.s32 1, %s3
  %s6 = scalar_select 0, %s5, %s3
  $region1: #{tpu_custom_call.1} parent=0
    #allocation3 [shape = 'u8[8192]{0}', space=vmem, size = 0x2000, scoped, tag = 'input window, operand 0, single buffered']
    #allocation4 [shape = 's32[1]{0}', space=sflag, size = 0x4, scoped, tag = 'scoped memory for tpu_custom_call.1']
    #allocation5 [shape = 's32[1]{0}', space=sflag, size = 0x4, scoped, tag = 'scoped memory for tpu_custom_call.1']
    #allocation6 [shape = 'u8[8192]{0}', space=vmem, size = 0x2000, scoped, tag = 'input window, operand 1, single buffered']
    #allocation7 [shape = 's32[1]{0}', space=sflag, size = 0x4, scoped, tag = 'scoped memory for tpu_custom_call.1']
    #allocation8 [shape = 'u8[512]{0}', space=vmem, size = 0x400, scoped, tag = 'output window, operand 0, single buffered']
    %7 = vsyncpa [#allocation4], 0
    %8 = vsyncpa [#allocation7], 0
    %9 = vsyncpa [#allocation5], 0
    // Predicated region
    $region2: #{tpu_custom_call.1} parent=1 // pred_check
      _
    $region3: #{tpu_custom_call.1} parent=1 // pred_check_branch
      %11 = sbr.rel (0) target = $region5
    $region4: #{tpu_custom_call.1} parent=1 // pred_region
      %s12 = sadd.s32 0, 0
      %s13 = smul.u32 2, %s12
      %s15 = ssub.s32 256, 256
      %16 = vsyncadd [#allocation4], %s15
      %s17 = smul.addr %s13, 128
      %s18 = scalar_lea.hbm %s0, %s17
      %s19 = sshll.u32 [#allocation3], 4
      %s20 = int_to_ptr.vmem [resolvable:$true] %s19
      %25 = dma.hbm_to_vmem [thread:$0]  %s18, 256, %s20, [#allocation4], 128, 128, 8
    $region5: #{tpu_custom_call.1} parent=1 // pred_fallthru
      _
    // Predicated region
    $region6: #{tpu_custom_call.1} parent=1 // pred_check
      _
    $region7: #{tpu_custom_call.1} parent=1 // pred_check_branch
      %27 = sbr.rel (0) target = $region9
    $region8: #{tpu_custom_call.1} parent=1 // pred_region
      %s28 = sadd.s32 0, 0
      %s29 = smul.u32 2, %s28
      %s31 = ssub.s32 256, 256
      %32 = vsyncadd [#allocation7], %s31
      %s33 = smul.addr %s29, 128
      %s34 = scalar_lea.hbm %s1, %s33
      %s35 = sshll.u32 [#allocation6], 4
      %s36 = int_to_ptr.vmem [resolvable:$true] %s35
      %41 = dma.hbm_to_vmem [thread:$0]  %s34, 256, %s36, [#allocation7], 128, 128, 8
    $region9: #{tpu_custom_call.1} parent=1 // pred_fallthru
      _
    // Predicated region
    $region10: #{tpu_custom_call.1} parent=1 // pred_check
      _
    $region11: #{tpu_custom_call.1} parent=1 // pred_check_branch
      %43 = sbr.rel (0) target = $region13
    $region12: #{tpu_custom_call.1} parent=1 // pred_region
      %44 = dma.done [#allocation4], 256
    $region13: #{tpu_custom_call.1} parent=1 // pred_fallthru
      _
    // Predicated region
    $region14: #{tpu_custom_call.1} parent=1 // pred_check
      _
    $region15: #{tpu_custom_call.1} parent=1 // pred_check_branch
      %46 = sbr.rel (0) target = $region17
    $region16: #{tpu_custom_call.1} parent=1 // pred_region
      %47 = dma.done [#allocation7], 256
    $region17: #{tpu_custom_call.1} parent=1 // pred_fallthru
      _
    %s48 = sadd.s32 0, 0
    %s49 = smul.u32 2, %s48
    %s50 = sadd.s32 0, 0
    %s51 = smul.u32 2, %s50
    %p52 = scmp.eq.s32.totalorder 0, 0
    // Predicated region
    $region18: #{tpu_custom_call.1} parent=1 // pred_check
      %p53 = pneg %p52
    $region19: #{tpu_custom_call.1} parent=1 // pred_check_branch
      %55 = sbr.rel (%p53) target = $region21
    $region20: #{tpu_custom_call.1} parent=1 // pred_region
      %56 = vst [vmem:[#allocation2] sm:$0xff] 0.0
    $region21: #{tpu_custom_call.1} parent=1 // pred_fallthru
      _
    %v57 = vld [vmem:[#allocation3] sm:$0xff]
    %v58 = vld [vmem:[#allocation3 + $0x8] sm:$0xff]
    %v59 = vld [vmem:[#allocation6] sm:$0xff]
    %v60 = vld [vmem:[#allocation6 + $0x8] sm:$0xff]
    %v61 = vxor.u32 %v57, 2147483648
    %v62 = vxor.u32 %v58, 2147483648
    %v63 = vmul.f32 %v61, 1.442695
    %v64 = vpow.pop %v63
    %v65 = vmul.f32 %v62, 1.442695
    %v66 = vpow.pop %v65
    %v67 = vadd.f32 %v64, 1.0
    %v68 = vadd.f32 %v66, 1.0
    %v69 = vrcp.pop %v67
    %v70 = vmul.f32 1.0, %v69
    %v71 = vrcp.pop %v68
    %v72 = vmul.f32 1.0, %v71
    %v73 = vmul.f32 %v70, %v59
    %v74 = vmul.f32 %v72, %v60
    %v75 = vsub.f32 1.0, %v70
    %v76 = vsub.f32 1.0, %v72
    %v77 = vmul.f32 %v75, %v59
    %v78 = vmul.f32 %v76, %v60
    %v79 = vsub.f32 1.0, %v59
    %v80 = vsub.f32 1.0, %v60
    %v81 = vmul.f32 %v70, %v79
    %v82 = vmul.f32 %v72, %v80
    %v83 = vmul.f32 %v81, 0.3
    %v84 = vmul.f32 %v82, 0.3
    %v85 = vmul.f32 %v77, 0.7
    %v86 = vmul.f32 %v78, 0.7
    %v87 = vadd.f32 %v83, %v85
    %v88 = vadd.f32 %v84, %v86
    %v89 = vadd.f32 %v87, 1e-09
    %v90 = vadd.f32 %v88, 1e-09
    %v91 = vadd.f32 %v73, %v87
    %v92 = vadd.f32 %v74, %v88
    %v93 = vadd.f32 %v91, 1e-09
    %v94 = vadd.f32 %v92, 1e-09
    %v95 = vrcp.pop %v93
    %v96 = vrcp.pop %v94
    %v97 = vmul.f32 %v89, %v95
    %v98 = vmul.f32 %v90, %v96
    %v99 = vld [vmem:[#allocation2] sm:$0xff]
    %v100 = vadd.f32 %v97, %v98
    %v101 = vadd.f32 %v99, %v100
    %102 = vst [vmem:[#allocation2] sm:$0xff] %v101
    // Predicated region
    $region22: #{tpu_custom_call.1} parent=1 // pred_check
      %p103 = pneg %p52
    $region23: #{tpu_custom_call.1} parent=1 // pred_check_branch
      %105 = sbr.rel (%p103) target = $region25
    $region24: #{tpu_custom_call.1} parent=1 // pred_region
      %v106 = vld [vmem:[#allocation2] sm:$0xff]
      %v107 = vrot.slane %v106, 4
      %v108 = vadd.f32 %v106, %v107
      %v109 = vrot.slane %v108, 2
      %v110 = vadd.f32 %v108, %v109
      %v111 = vrot.slane %v110, 1
      %v112 = vadd.f32 %v110, %v111
      %113 = vst [vmem:[#allocation8] sm:$0x1] %v112
    $region25: #{tpu_custom_call.1} parent=1 // pred_fallthru
      _
    // Predicated region
    $region26: #{tpu_custom_call.1} parent=1 // pred_check
      _
    $region27: #{tpu_custom_call.1} parent=1 // pred_check_branch
      %115 = sbr.rel (0) target = $region29
    $region28: #{tpu_custom_call.1} parent=1 // pred_region
      %s117 = ssub.s32 16, 16
      %118 = vsyncadd [#allocation5], %s117
      %s120 = sshll.u32 [#allocation8], 4
      %s121 = int_to_ptr.vmem [resolvable:$true] %s120
      %123 = dma.vmem_to_hbm [thread:$0]  %s121, 16, %s2, [#allocation5]
    $region29: #{tpu_custom_call.1} parent=1 // pred_fallthru
      _
    // Predicated region
    $region30: #{tpu_custom_call.1} parent=1 // pred_check
      _
    $region31: #{tpu_custom_call.1} parent=1 // pred_check_branch
      %125 = sbr.rel (0) target = $region33
    $region32: #{tpu_custom_call.1} parent=1 // pred_region
      %126 = dma.done [#allocation5], 16
    $region33: #{tpu_custom_call.1} parent=1 // pred_fallthru
      _
    %127 = vsyncpa [#allocation4], 1
    %128 = vsyncpa [#allocation7], 1
    %129 = vsyncpa [#allocation5], 1

</llo_original>
